<compile_context>
chip_gen: v7x
topology: tpu7x:2x2x1
jax: 0.10.0
libtpu: 0.0.40
codegen_flags: <defaults>
</compile_context>

<pallas_src>
import functools

import jax
import jax.numpy as jnp
from jax.experimental import pallas as pl
from jax.experimental.pallas import tpu as pltpu

EPS = 1e-5  # PyTorch LayerNorm default eps


# --------------------------------------------------------------------------
# Kernels
# --------------------------------------------------------------------------
def layernorm_m_kernel(m_ref, g_ref, b_ref, out_ref):
    m = m_ref[...].astype(jnp.float32)                        # (N, C_m)
    mu = jnp.mean(m, axis=-1, keepdims=True)
    mc = m - mu
    var = jnp.mean(mc * mc, axis=-1, keepdims=True)
    mn = mc * jax.lax.rsqrt(var + EPS)
    out_ref[...] = (mn * g_ref[...] + b_ref[...]).astype(out_ref.dtype)


def pair_kernel(z_ref, d_ref, lo_ref, hi_ref, w_ref, b_ref, g_ref, beta_ref,
                out_ref):
    # --- LayerNorm over C_z ----------------------------------------------
    z = z_ref[...].astype(jnp.float32)                        # (ti, tj, C_z)
    mu = jnp.mean(z, axis=-1, keepdims=True)
    zc = z - mu
    var = jnp.mean(zc * zc, axis=-1, keepdims=True)
    zn = zc * jax.lax.rsqrt(var + EPS)                        # rsqrt -> EUP
    zn = zn * g_ref[...][None] + beta_ref[...][None]

    # --- distogram one-hot from precomputed squared distances -------------
    d = d_ref[...].astype(jnp.float32)[:, :, None]            # (ti, tj, 1)
    lo = lo_ref[...][None]                                    # (1, 1, B)
    hi = hi_ref[...][None]
    onehot = jnp.logical_and(d > lo, d < hi).astype(jnp.float32)

    # --- Linear(no_bins -> C_z) on the MXU + residual add ------------------
    ti, tj, _ = zn.shape
    nb = w_ref.shape[0]
    d_emb = jnp.dot(onehot.reshape(ti * tj, nb), w_ref[...],
                    preferred_element_type=jnp.float32)
    d_emb = d_emb.reshape(ti, tj, -1) + b_ref[...][None]

    out_ref[...] = (zn + d_emb).astype(out_ref.dtype)


# --------------------------------------------------------------------------
# Tiling / VMEM budgeting
# --------------------------------------------------------------------------
def _vmem_sizes():
    """(block budget, scoped limit) in bytes, generation aware."""
    try:
        phys = int(pltpu.get_tpu_info().vmem_capacity_bytes)
    except Exception:
        phys = 64 << 20                       # conservative (v7x per-TC VMEM)
    budget = min(int(phys * 0.60), 96 << 20)  # what the pipelined z blocks may use
    limit = min(int(phys * 0.85), 112 << 20)  # scoped-VMEM ceiling handed to Mosaic
    return budget, limit


def _choose_tiles(n_res, c_z, budget_bytes):
    """Pick (ti, tj) pair-block tiles.  Roughly 6 f32 copies of a
    (ti, tj, C_z) block are live at once (in + out double-buffered plus
    in-kernel temporaries)."""
    def max_ti(tj):
        return budget_bytes // (6 * tj * c_z * 4)

    tj = n_res
    if max_ti(tj) < 8:                        # very long sequences: tile j too
        for cand in (2048, 1024, 512, 256, 128):
            if cand < n_res and max_ti(cand) >= 8:
                tj = cand
                break
        else:
            tj = min(n_res, 128)

    ti = int(max(1, min(256, max_ti(tj), n_res)))
    if ti >= 8:
        ti -= ti % 8                          # keep sublane-aligned row tiles
    return ti, tj


# --------------------------------------------------------------------------
# Wrapper
# --------------------------------------------------------------------------
def recycling_embedder(m, z, x, params, *, min_bin, max_bin, no_bins, inf=1e8):
    """Returns (m_update, z_update) matching RecyclingEmbedder.forward."""
    n_res, c_m = m.shape
    c_z = z.shape[-1]

    budget, vmem_limit = _vmem_sizes()
    ti, tj = _choose_tiles(n_res, c_z, budget)

    # distogram bin edges (squared)
    bins = jnp.linspace(min_bin, max_bin, no_bins, dtype=jnp.float32)
    sq_bins = bins ** 2
    upper = jnp.concatenate([sq_bins[1:], jnp.array([inf], dtype=jnp.float32)])
    lo = sq_bins.reshape(1, no_bins)
    hi = upper.reshape(1, no_bins)

    g_m = params["ln_m_w"].reshape(1, c_m)
    b_m = params["ln_m_b"].reshape(1, c_m)
    g_z = params["ln_z_w"].reshape(1, c_z)
    b_z = params["ln_z_b"].reshape(1, c_z)
    w = params["lin_w"]                       # (no_bins, c_z) == torch weight.T
    b = params["lin_b"].reshape(1, c_z)

    # ---- m LayerNorm: m is tiny -> single block, no grid overhead --------
    m_update = pl.pallas_call(
        layernorm_m_kernel,
        out_shape=jax.ShapeDtypeStruct((n_res, c_m), m.dtype),
        grid=(1,),
        in_specs=[pl.BlockSpec((n_res, c_m), lambda i: (0, 0)),
                  pl.BlockSpec((1, c_m), lambda i: (0, 0)),
                  pl.BlockSpec((1, c_m), lambda i: (0, 0))],
        out_specs=pl.BlockSpec((n_res, c_m), lambda i: (0, 0)),
    )(m, g_m, b_m)

    # ---- pair update: LN(z) + distogram embed, tiled over (i, j) ----------
    # Squared distances precomputed outside the kernel (adds only N^2*4 B of
    # HBM traffic, <1% of the z traffic) so the kernel never touches the
    # lane-wasteful (ti, N, 3) coordinate intermediate.
    d = jnp.sum((x[:, None, :] - x[None, :, :]) ** 2, axis=-1)  # (N, N)

    n_i = pl.cdiv(n_res, ti) * ti
    n_j = pl.cdiv(n_res, tj) * tj
    z_in, d_in = z, d
    if (n_i, n_j) != (n_res, n_res):
        z_in = jnp.pad(z, ((0, n_i - n_res), (0, n_j - n_res), (0, 0)))
        d_in = jnp.pad(d, ((0, n_i - n_res), (0, n_j - n_res)))

    z_update = pl.pallas_call(
        pair_kernel,
        out_shape=jax.ShapeDtypeStruct((n_i, n_j, c_z), z.dtype),
        grid=(n_i // ti, n_j // tj),
        in_specs=[pl.BlockSpec((ti, tj, c_z), lambda i, j: (i, j, 0)),   # z
                  pl.BlockSpec((ti, tj), lambda i, j: (i, j)),           # d^2
                  pl.BlockSpec((1, no_bins), lambda i, j: (0, 0)),       # lower^2
                  pl.BlockSpec((1, no_bins), lambda i, j: (0, 0)),       # upper^2
                  pl.BlockSpec((no_bins, c_z), lambda i, j: (0, 0)),     # W
                  pl.BlockSpec((1, c_z), lambda i, j: (0, 0)),           # bias
                  pl.BlockSpec((1, c_z), lambda i, j: (0, 0)),           # ln_z gamma
                  pl.BlockSpec((1, c_z), lambda i, j: (0, 0))],          # ln_z beta
        out_specs=pl.BlockSpec((ti, tj, c_z), lambda i, j: (i, j, 0)),
        compiler_params=pltpu.CompilerParams(
            dimension_semantics=("parallel", "parallel"),
            vmem_limit_bytes=vmem_limit),
    )(z_in, d_in, lo, hi, w, b, g_z, b_z)

    if (n_i, n_j) != (n_res, n_res):
        z_update = z_update[:n_res, :n_res]

    return m_update, z_update


# --------------------------------------------------------------------------
# Pure-JAX reference mirroring the PyTorch forward pass
# --------------------------------------------------------------------------
def reference(m, z, x, params, *, min_bin, max_bin, no_bins, inf=1e8):
    def ln(v, w, b):
        mu = jnp.mean(v, axis=-1, keepdims=True)
        var = jnp.mean((v - mu) ** 2, axis=-1, keepdims=True)
        return (v - mu) * jax.lax.rsqrt(var + EPS) * w + b

    m_u = ln(m, params["ln_m_w"], params["ln_m_b"])
    z_u = ln(z, params["ln_z_w"], params["ln_z_b"])

    bins = jnp.linspace(min_bin, max_bin, no_bins, dtype=x.dtype)
    sq = bins ** 2
    upper = jnp.concatenate([sq[1:], jnp.array([inf], dtype=x.dtype)])
    d = jnp.sum((x[..., None, :] - x[..., None, :, :]) ** 2, axis=-1,
                keepdims=True)                                   # (N, N, 1)
    oh = ((d > sq) & (d < upper)).astype(x.dtype)                # (N, N, B)
    d_emb = oh @ params["lin_w"] + params["lin_b"]
    return m_u, z_u + d_emb


if __name__ == "__main__":
    # Small, module-consistent shapes.  inplace_safe=True (torch in-place
    # copy_) has no JAX analogue; the functional updates are returned.
    no_bins = 15
    min_bin, max_bin, inf = 3.25, 20.75, 1e8
    c_m, c_z = 32, 32

    key = jax.random.PRNGKey(0)
    k_w, k_b, k_gm, k_bm, k_gz, k_bz, k_data = jax.random.split(key, 7)
    params = {
        "lin_w": 0.1 * jax.random.normal(k_w, (no_bins, c_z), jnp.float32),
        "lin_b": 0.1 * jax.random.normal(k_b, (c_z,), jnp.float32),
        "ln_m_w": 1.0 + 0.1 * jax.random.normal(k_gm, (c_m,), jnp.float32),
        "ln_m_b": 0.05 * jax.random.normal(k_bm, (c_m,), jnp.float32),
        "ln_z_w": 1.0 + 0.1 * jax.random.normal(k_gz, (c_z,), jnp.float32),
        "ln_z_b": 0.05 * jax.random.normal(k_bz, (c_z,), jnp.float32),
    }

    run = functools.partial(recycling_embedder, min_bin=min_bin,
                            max_bin=max_bin, no_bins=no_bins, inf=inf)
    ref = functools.partial(reference, min_bin=min_bin, max_bin=max_bin,
                            no_bins=no_bins, inf=inf)

    # n_res=16: tiles equal the full array; n_res=20: exercises the ragged
    # row-tile padding path (pad + slice).
    for n_res in (16, 20):
        k_m, k_z, k_x = jax.random.split(jax.random.fold_in(k_data, n_res), 3)
        m = jax.random.normal(k_m, (n_res, c_m), dtype=jnp.float32)
        z = jax.random.normal(k_z, (n_res, n_res, c_z), dtype=jnp.float32)
        x = 10.0 * jax.random.normal(k_x, (n_res, 3), dtype=jnp.float32)

        m_upd, z_upd = jax.block_until_ready(run(m, z, x, params))
        m_ref, z_ref = ref(m, z, x, params)

        assert m_upd.shape == (n_res, c_m)
        assert z_upd.shape == (n_res, n_res, c_z)
        assert jnp.allclose(m_upd, m_ref, atol=1e-4, rtol=1e-4)
        assert jnp.allclose(z_upd, z_ref, atol=1e-4, rtol=1e-4)

    print("KERNEL_OK")
</pallas_src>

<mosaic_0001>
module attributes {stable_mosaic.version = 11 : i64} {
  func.func @layernorm_m_kernel(%arg0: i32, %arg1: memref<16x32xf32, #tpu.memory_space<vmem>>, %arg2: memref<1x32xf32, #tpu.memory_space<vmem>>, %arg3: memref<1x32xf32, #tpu.memory_space<vmem>>, %arg4: memref<16x32xf32, #tpu.memory_space<vmem>>) attributes {dimension_semantics = [#tpu.dimension_semantics<arbitrary>], iteration_bounds = array<i64: 1>, scalar_prefetch = 0 : i64, scratch_operands = 0 : i64, tpu.core_type = #tpu.core_type<tc>, window_params = [{pipeline_mode = #tpu.pipeline_mode<synchronous>, transform_indices = @transform_0, window_bounds = array<i64: 16, 32>}, {pipeline_mode = #tpu.pipeline_mode<synchronous>, transform_indices = @transform_1, window_bounds = array<i64: 1, 32>}, {pipeline_mode = #tpu.pipeline_mode<synchronous>, transform_indices = @transform_2, window_bounds = array<i64: 1, 32>}, {pipeline_mode = #tpu.pipeline_mode<synchronous>, transform_indices = @transform_3, window_bounds = array<i64: 16, 32>}]} {
    %c0 = arith.constant 0 : index
    %c0_0 = arith.constant 0 : index
    %0 = vector.load %arg1[%c0, %c0_0] : memref<16x32xf32, #tpu.memory_space<vmem>>, vector<16x32xf32>
    %cst = arith.constant dense<0.000000e+00> : vector<16xf32>
    %1 = vector.multi_reduction <add>, %0, %cst [1] : vector<16x32xf32> to vector<16xf32>
    %2 = vector.shape_cast %1 : vector<16xf32> to vector<16x1xf32>
    %cst_1 = arith.constant 3.200000e+01 : f32
    %3 = vector.broadcast %cst_1 : f32 to vector<16x1xf32>
    %4 = arith.divf %2, %3 : vector<16x1xf32>
    %5 = vector.broadcast %4 : vector<16x1xf32> to vector<16x32xf32>
    %6 = arith.subf %0, %5 : vector<16x32xf32>
    %7 = arith.mulf %6, %6 : vector<16x32xf32>
    %cst_2 = arith.constant dense<0.000000e+00> : vector<16xf32>
    %8 = vector.multi_reduction <add>, %7, %cst_2 [1] : vector<16x32xf32> to vector<16xf32>
    %9 = vector.shape_cast %8 : vector<16xf32> to vector<16x1xf32>
    %cst_3 = arith.constant 3.200000e+01 : f32
    %10 = vector.broadcast %cst_3 : f32 to vector<16x1xf32>
    %11 = arith.divf %9, %10 : vector<16x1xf32>
    %cst_4 = arith.constant 9.99999974E-6 : f32
    %12 = vector.broadcast %cst_4 : f32 to vector<16x1xf32>
    %13 = arith.addf %11, %12 : vector<16x1xf32>
    %14 = math.rsqrt %13 : vector<16x1xf32>
    %15 = vector.broadcast %14 : vector<16x1xf32> to vector<16x32xf32>
    %16 = arith.mulf %6, %15 : vector<16x32xf32>
    %c0_5 = arith.constant 0 : index
    %c0_6 = arith.constant 0 : index
    %17 = vector.load %arg2[%c0_5, %c0_6] : memref<1x32xf32, #tpu.memory_space<vmem>>, vector<1x32xf32>
    %18 = vector.broadcast %17 : vector<1x32xf32> to vector<16x32xf32>
    %19 = arith.mulf %16, %18 : vector<16x32xf32>
    %c0_7 = arith.constant 0 : index
    %c0_8 = arith.constant 0 : index
    %20 = vector.load %arg3[%c0_7, %c0_8] : memref<1x32xf32, #tpu.memory_space<vmem>>, vector<1x32xf32>
    %21 = vector.broadcast %20 : vector<1x32xf32> to vector<16x32xf32>
    %22 = arith.addf %19, %21 : vector<16x32xf32>
    %c0_9 = arith.constant 0 : index
    %c0_10 = arith.constant 0 : index
    %23 = vector.load %arg4[%c0_9, %c0_10] : memref<16x32xf32, #tpu.memory_space<vmem>>, vector<16x32xf32>
    tpu.vector_store %arg4[%c0_9, %c0_10], %22 {strides = array<i32>} : memref<16x32xf32, #tpu.memory_space<vmem>>, vector<16x32xf32>,
    return
  }
  func.func @transform_0(%arg0: i32) -> (i32, i32) {
    %c0_i32 = arith.constant 0 : i32
    %c0_i32_0 = arith.constant 0 : i32
    %c0_i32_1 = arith.constant 0 : i32
    return %c0_i32, %c0_i32_0 : i32, i32
  }
  func.func @transform_1(%arg0: i32) -> (i32, i32) {
    %c0_i32 = arith.constant 0 : i32
    %c0_i32_0 = arith.constant 0 : i32
    %c0_i32_1 = arith.constant 0 : i32
    return %c0_i32, %c0_i32_0 : i32, i32
  }
  func.func @transform_2(%arg0: i32) -> (i32, i32) {
    %c0_i32 = arith.constant 0 : i32
    %c0_i32_0 = arith.constant 0 : i32
    %c0_i32_1 = arith.constant 0 : i32
    return %c0_i32, %c0_i32_0 : i32, i32
  }
  func.func @transform_3(%arg0: i32) -> (i32, i32) {
    %c0_i32 = arith.constant 0 : i32
    %c0_i32_0 = arith.constant 0 : i32
    %c0_i32_1 = arith.constant 0 : i32
    return %c0_i32, %c0_i32_0 : i32, i32
  }
}

</mosaic_0001>

<llo_original>
// kernel: tpu_custom_call.1
$region0: #{tpu_custom_call.1}
  #allocation0 [shape = 'u32[]', space=smem, size = 0x4, offset = 0x4, fixed_abs, tag = 'smem constant byte address 0x4 - core index']
  #allocation1 [shape = 'u32[144,128]{1,0:T(1,128)}', space=vmem, size = 0x12000, scoped, tag = 'internal scratch']
  %s0 = inlined_call_operand.hbm [shape: f32[16,32], index: 0, kind: input, shape index: {}]
  %s1 = inlined_call_operand.vmem [shape: f32[1,32], index: 1, kind: input, shape index: {}]
  %s2 = inlined_call_operand.vmem [shape: f32[1,32], index: 2, kind: input, shape index: {}]
  %s3 = inlined_call_operand.hbm [shape: f32[16,32], index: 3, kind: output, shape index: {}]
  %s4 = sld [smem:[#allocation0]]
  $region26: #{tpu_custom_call.1} parent=0
    _
  %s6 = ssub.s32 1, %s4
  %s7 = scalar_select 0, %s6, %s4
  $region1: #{tpu_custom_call.1} parent=0
    #allocation2 [shape = 'u8[8192]{0}', space=vmem, size = 0x2000, scoped, tag = 'input window, operand 0, single buffered']
    #allocation3 [shape = 's32[1]{0}', space=sflag, size = 0x4, scoped, tag = 'scoped memory for tpu_custom_call.1']
    #allocation4 [shape = 's32[1]{0}', space=sflag, size = 0x4, scoped, tag = 'scoped memory for tpu_custom_call.1']
    #allocation5 [shape = 'u8[8192]{0}', space=vmem, size = 0x2000, scoped, tag = 'output window, operand 0, single buffered']
    %8 = vsyncpa [#allocation3], 0
    %9 = vsyncpa [#allocation4], 0
    // Predicated region
    $region2: #{tpu_custom_call.1} parent=1 // pred_check
      _
    $region3: #{tpu_custom_call.1} parent=1 // pred_check_branch
      %11 = sbr.rel (0) target = $region5
    $region4: #{tpu_custom_call.1} parent=1 // pred_region
      %s13 = ssub.s32 256, 256
      %14 = vsyncadd [#allocation3], %s13
      %s15 = sshll.u32 [#allocation2], 4
      %s16 = int_to_ptr.vmem [resolvable:$true] %s15
      %21 = dma.hbm_to_vmem [thread:$0]  %s0, 256, %s16, [#allocation3], 128, 128, 8
    $region5: #{tpu_custom_call.1} parent=1 // pred_fallthru
      _
    // Predicated region
    $region6: #{tpu_custom_call.1} parent=1 // pred_check
      _
    $region7: #{tpu_custom_call.1} parent=1 // pred_check_branch
      %23 = sbr.rel (0) target = $region9
    $region8: #{tpu_custom_call.1} parent=1 // pred_region
      _
    $region9: #{tpu_custom_call.1} parent=1 // pred_fallthru
      _
    // Predicated region
    $region10: #{tpu_custom_call.1} parent=1 // pred_check
      _
    $region11: #{tpu_custom_call.1} parent=1 // pred_check_branch
      %25 = sbr.rel (0) target = $region13
    $region12: #{tpu_custom_call.1} parent=1 // pred_region
      _
    $region13: #{tpu_custom_call.1} parent=1 // pred_fallthru
      _
    // Predicated region
    $region14: #{tpu_custom_call.1} parent=1 // pred_check
      _
    $region15: #{tpu_custom_call.1} parent=1 // pred_check_branch
      %27 = sbr.rel (0) target = $region17
    $region16: #{tpu_custom_call.1} parent=1 // pred_region
      %28 = dma.done [#allocation3], 256
    $region17: #{tpu_custom_call.1} parent=1 // pred_fallthru
      _
    %v29 = vld [vmem:[#allocation2] sm:$0xff]
    %v30 = vld [vmem:[#allocation2 + $0x8] sm:$0xff]
    %vm31 = vcmask 261120
    %v32 = vsel %vm31, %v29, 0.0
    %33 = vadd.xlane.f32.xlu0 %v32
    %v34 = vpop.xlane.xlu0 %33
    %v35 = vsel %vm31, %v30, 0.0
    %36 = vadd.xlane.f32.xlu0 %v35
    %v37 = vpop.xlane.xlu0 %36
    %v38 = vrcp.pop 32.0
    %v39 = vmul.f32 %v34, %v38
    %v40 = vmul.f32 %v37, %v38
    %v41 = vsub.f32 %v29, %v39
    %v42 = vsub.f32 %v30, %v40
    %v43 = vmul.f32 %v41, %v41
    %v44 = vmul.f32 %v42, %v42
    %v45 = vsel %vm31, %v43, 0.0
    %46 = vadd.xlane.f32.xlu0 %v45
    %v47 = vpop.xlane.xlu0 %46
    %v48 = vsel %vm31, %v44, 0.0
    %49 = vadd.xlane.f32.xlu0 %v48
    %v50 = vpop.xlane.xlu0 %49
    %v51 = vmul.f32 %v47, %v38
    %v52 = vmul.f32 %v50, %v38
    %v53 = vadd.f32 %v51, 1e-05
    %v54 = vadd.f32 %v52, 1e-05
    %v55 = vrsqrt.pop %v53
    %v56 = vrsqrt.pop %v54
    %v57 = vmul.f32 %v41, %v55
    %v58 = vmul.f32 %v42, %v56
    %v59 = vld [vmem:[%s1] sm:$0x1]
    %v61 = vlaneseq
    %v62 = vshrl.u32 %v61, 7
    %v63 = vsub.s32 0, %v62
    %v64 = vrot.slane %v59, %v63
    %v66 = vmul.f32 %v57, %v64
    %v67 = vmul.f32 %v58, %v64
    %v68 = vld [vmem:[%s2] sm:$0x1]
    %v70 = vlaneseq
    %v71 = vshrl.u32 %v70, 7
    %v72 = vsub.s32 0, %v71
    %v73 = vrot.slane %v68, %v72
    %v75 = vadd.f32 %v66, %v73
    %v76 = vadd.f32 %v67, %v73
    %77 = vst.msk [vmem:[#allocation5] sm:$0xff] %vm31, %v75
    %78 = vst.msk [vmem:[#allocation5 + $0x8] sm:$0xff] %vm31, %v76
    // Predicated region
    $region18: #{tpu_custom_call.1} parent=1 // pred_check
      _
    $region19: #{tpu_custom_call.1} parent=1 // pred_check_branch
      %80 = sbr.rel (0) target = $region21
    $region20: #{tpu_custom_call.1} parent=1 // pred_region
      %s82 = ssub.s32 256, 256
      %83 = vsyncadd [#allocation4], %s82
      %s84 = sshll.u32 [#allocation5], 4
      %s85 = int_to_ptr.vmem [resolvable:$true] %s84
      %90 = dma.vmem_to_hbm [thread:$0]  %s85, 256, %s3, [#allocation4], 128, 128, 8
    $region21: #{tpu_custom_call.1} parent=1 // pred_fallthru
      _
    // Predicated region
    $region22: #{tpu_custom_call.1} parent=1 // pred_check
      _
    $region23: #{tpu_custom_call.1} parent=1 // pred_check_branch
      %92 = sbr.rel (0) target = $region25
    $region24: #{tpu_custom_call.1} parent=1 // pred_region
      %93 = dma.done [#allocation4], 256
    $region25: #{tpu_custom_call.1} parent=1 // pred_fallthru
      _
    %94 = vsyncpa [#allocation3], 1
    %95 = vsyncpa [#allocation4], 1

</llo_original>
